<compile_context>
chip_gen: v7x
topology: tpu7x:2x2x1
jax: 0.10.0
libtpu: 0.0.40
codegen_flags: <defaults>
</compile_context>

<pallas_src>
import jax
import jax.numpy as jnp
from jax import lax
from jax.experimental import pallas as pl
from jax.experimental.pallas import tpu as pltpu

_TC = 128  # in-kernel sub-chunk along the sample axis (one full lane group)


# --------------------------------------------------------------------------- #
# Pallas kernel: fused 3-layer MLP on one (tm, d_in) row-major tile of samples
# --------------------------------------------------------------------------- #
def _mlp_kernel(x_ref, w1_ref, b1_ref, w2_ref, b2_ref, w3_ref, b3_ref, o_ref):
    # Load resident weights/biases once per grid step (hoisted out of the loop).
    w1 = w1_ref[...]   # (H, d_in)  bf16
    b1 = b1_ref[...]   # (H, 1)     f32
    w2 = w2_ref[...]   # (H, H)     bf16
    b2 = b2_ref[...]   # (H, 1)     f32
    w3 = w3_ref[...]   # (d_out, H) bf16
    b3 = b3_ref[...]   # (d_out, 1) f32

    n_sub = x_ref.shape[0] // _TC  # static: tm is a multiple of _TC

    def body(c, carry):
        r0 = pl.multiple_of(c * _TC, _TC)
        # (TC, d_in) f32 slice -> (d_in, TC) lane-dense bf16 (cast in-kernel;
        # the HBM input stays in its native f32 row-major layout).
        xt = x_ref[pl.ds(r0, _TC), :].T.astype(jnp.bfloat16)
        h = jnp.dot(w1, xt, preferred_element_type=jnp.float32) + b1
        h = jnp.maximum(h, 0.0).astype(jnp.bfloat16)
        h = jnp.dot(w2, h, preferred_element_type=jnp.float32) + b2
        h = jnp.maximum(h, 0.0).astype(jnp.bfloat16)
        o = jnp.dot(w3, h, preferred_element_type=jnp.float32) + b3   # (d_out, TC) f32
        # Small XLU transpose back to row-major -> contiguous (M, d_out) writeback,
        # no host-side transpose epilogue.
        o_ref[pl.ds(r0, _TC), :] = o.T.astype(o_ref.dtype)
        return carry

    lax.fori_loop(0, n_sub, body, 0, unroll=True)


# --------------------------------------------------------------------------- #
# Wrappers
# --------------------------------------------------------------------------- #
def vamp_encoder(x2d, params, *, tm=4096):
    """Fused MLP on a (M, state_dim) slab. Returns (M, 2*obs_dim) f32."""
    w1, b1, w2, b2, w3, b3 = params
    M, d_in = x2d.shape
    H = w1.shape[0]
    d_out = w3.shape[0]

    # Clamp the row tile: multiple of the in-kernel sub-chunk, no wider than the
    # (sub-chunk-rounded) data.  No explicit padding: Pallas handles the ragged
    # last block (only the valid output region is written back).
    tm = min(tm, pl.cdiv(M, _TC) * _TC)
    tm = max(_TC, (tm // _TC) * _TC)
    grid = (pl.cdiv(M, tm),)

    resident = lambda i: (0, 0)  # constant-index -> weights stay resident in VMEM

    out = pl.pallas_call(
        _mlp_kernel,
        out_shape=jax.ShapeDtypeStruct((M, d_out), jnp.float32),
        grid_spec=pltpu.PrefetchScalarGridSpec(
            num_scalar_prefetch=0,
            grid=grid,
            in_specs=[
                pl.BlockSpec((tm, d_in), lambda i: (i, 0)),   # x tile, native f32 row-major
                pl.BlockSpec((H, d_in), resident),            # W1 (out, in) bf16
                pl.BlockSpec((H, 1), resident),               # b1           f32
                pl.BlockSpec((H, H), resident),               # W2           bf16
                pl.BlockSpec((H, 1), resident),               # b2           f32
                pl.BlockSpec((d_out, H), resident),           # W3           bf16
                pl.BlockSpec((d_out, 1), resident),           # b3           f32
            ],
            out_specs=pl.BlockSpec((tm, d_out), lambda i: (i, 0)),
        ),
        compiler_params=pltpu.CompilerParams(
            dimension_semantics=("parallel",),   # sample tiles are independent
        ),
    )(x2d.astype(jnp.float32), w1, b1, w2, b2, w3, b3)
    return out


def realobs2complex(obs):
    """(..., 2*obs_dim) real -> (..., obs_dim) complex (torch.view_as_complex)."""
    psi = obs.reshape(obs.shape[:-1] + (obs.shape[-1] // 2, 2))
    return jax.lax.complex(psi[..., 0], psi[..., 1])


def vamp_forward(x, params, *, tm=4096):
    """x: (batch, time, state_dim) -> complex (batch, time, obs_dim)."""
    B, T, d_in = x.shape
    d_out = params[4].shape[0]          # W3 is (2*obs_dim, H)
    enc = vamp_encoder(x.reshape(B * T, d_in), params, tm=tm)
    return realobs2complex(enc.reshape(B, T, d_out))


# --------------------------------------------------------------------------- #
# Deterministic parameter init (PyTorch-Linear-like uniform init)
#   Weights (out_features, in_features) in bf16 (MXU dtype); biases (out, 1) f32.
# --------------------------------------------------------------------------- #
def init_params(key, state_dim, obs_dim, n_hidden):
    dims = [state_dim, n_hidden, n_hidden, 2 * obs_dim]
    params = []
    for li in range(3):
        key, kw, kb = jax.random.split(key, 3)
        fan_in, fan_out = dims[li], dims[li + 1]
        bound = 1.0 / jnp.sqrt(fan_in)
        w = jax.random.uniform(kw, (fan_out, fan_in), jnp.float32, -bound, bound)
        b = jax.random.uniform(kb, (fan_out, 1), jnp.float32, -bound, bound)
        params += [w.astype(jnp.bfloat16), b]
    return tuple(params)


def _reference_forward(x, params):
    """Plain-JAX reference with identical bf16-operand / f32-accumulate math."""
    w1, b1, w2, b2, w3, b3 = params
    B, T, d_in = x.shape
    h = x.reshape(-1, d_in).astype(jnp.bfloat16)
    h = jnp.maximum(jnp.dot(h, w1.T, preferred_element_type=jnp.float32) + b1[:, 0], 0.0)
    h = jnp.maximum(jnp.dot(h.astype(jnp.bfloat16), w2.T,
                            preferred_element_type=jnp.float32) + b2[:, 0], 0.0)
    o = jnp.dot(h.astype(jnp.bfloat16), w3.T,
                preferred_element_type=jnp.float32) + b3[:, 0]
    return realobs2complex(o.reshape(B, T, -1))


if __name__ == "__main__":
    # Small, forward-consistent shapes.
    state_dim = 12
    obs_dim = 8          # encoder output dim = 2 * obs_dim = 16
    n_hidden = 32
    batch, time = 2, 8   # batch * time = 16 rows -> one ragged block

    key = jax.random.PRNGKey(0)
    kx, kp, kx2 = jax.random.split(key, 3)
    x = jax.random.normal(kx, (batch, time, state_dim), jnp.float32)
    params = init_params(kp, state_dim, obs_dim, n_hidden)

    z = vamp_forward(x, params)
    jax.block_until_ready(z)

    assert z.shape == (batch, time, obs_dim), z.shape
    assert jnp.iscomplexobj(z)
    ref = _reference_forward(x, params)
    assert jnp.allclose(z, ref, atol=2e-3, rtol=2e-3)

    # Ragged / multi-step check: M = 5*53 = 265 rows with tm=256 -> grid of 2
    # steps whose last block is partial (exercises the no-padding path).
    b2_, t2_ = 5, 53
    x_rag = jax.random.normal(kx2, (b2_, t2_, state_dim), jnp.float32)
    z_rag = vamp_forward(x_rag, params, tm=256)
    jax.block_until_ready(z_rag)
    assert z_rag.shape == (b2_, t2_, obs_dim), z_rag.shape
    ref_rag = _reference_forward(x_rag, params)
    assert jnp.allclose(z_rag, ref_rag, atol=2e-3, rtol=2e-3)

    print("KERNEL_OK")
</pallas_src>

<mosaic_0001>
module attributes {stable_mosaic.version = 11 : i64} {
  func.func @_mlp_kernel(%arg0: i32, %arg1: memref<128x12xf32, #tpu.memory_space<vmem>>, %arg2: memref<32x12xbf16, #tpu.memory_space<vmem>>, %arg3: memref<32x1xf32, #tpu.memory_space<vmem>>, %arg4: memref<32x32xbf16, #tpu.memory_space<vmem>>, %arg5: memref<32x1xf32, #tpu.memory_space<vmem>>, %arg6: memref<16x32xbf16, #tpu.memory_space<vmem>>, %arg7: memref<16x1xf32, #tpu.memory_space<vmem>>, %arg8: memref<128x16xf32, #tpu.memory_space<vmem>>) attributes {dimension_semantics = [#tpu.dimension_semantics<parallel>], iteration_bounds = array<i64: 1>, scalar_prefetch = 0 : i64, scratch_operands = 0 : i64, tpu.core_type = #tpu.core_type<tc>, window_params = [{transform_indices = @transform_0, window_bounds = array<i64: 128, 12>}, {pipeline_mode = #tpu.pipeline_mode<synchronous>, transform_indices = @transform_1, window_bounds = array<i64: 32, 12>}, {pipeline_mode = #tpu.pipeline_mode<synchronous>, transform_indices = @transform_2, window_bounds = array<i64: 32, 1>}, {pipeline_mode = #tpu.pipeline_mode<synchronous>, transform_indices = @transform_3, window_bounds = array<i64: 32, 32>}, {pipeline_mode = #tpu.pipeline_mode<synchronous>, transform_indices = @transform_4, window_bounds = array<i64: 32, 1>}, {pipeline_mode = #tpu.pipeline_mode<synchronous>, transform_indices = @transform_5, window_bounds = array<i64: 16, 32>}, {pipeline_mode = #tpu.pipeline_mode<synchronous>, transform_indices = @transform_6, window_bounds = array<i64: 16, 1>}, {transform_indices = @transform_7, window_bounds = array<i64: 128, 16>}]} {
    %c0 = arith.constant 0 : index
    %c0_0 = arith.constant 0 : index
    %0 = vector.load %arg2[%c0, %c0_0] : memref<32x12xbf16, #tpu.memory_space<vmem>>, vector<32x12xbf16>
    %c0_1 = arith.constant 0 : index
    %c0_2 = arith.constant 0 : index
    %1 = vector.load %arg3[%c0_1, %c0_2] : memref<32x1xf32, #tpu.memory_space<vmem>>, vector<32x1xf32>
    %c0_3 = arith.constant 0 : index
    %c0_4 = arith.constant 0 : index
    %2 = vector.load %arg4[%c0_3, %c0_4] : memref<32x32xbf16, #tpu.memory_space<vmem>>, vector<32x32xbf16>
    %c0_5 = arith.constant 0 : index
    %c0_6 = arith.constant 0 : index
    %3 = vector.load %arg5[%c0_5, %c0_6] : memref<32x1xf32, #tpu.memory_space<vmem>>, vector<32x1xf32>
    %c0_7 = arith.constant 0 : index
    %c0_8 = arith.constant 0 : index
    %4 = vector.load %arg6[%c0_7, %c0_8] : memref<16x32xbf16, #tpu.memory_space<vmem>>, vector<16x32xbf16>
    %c0_9 = arith.constant 0 : index
    %c0_10 = arith.constant 0 : index
    %5 = vector.load %arg7[%c0_9, %c0_10] : memref<16x1xf32, #tpu.memory_space<vmem>>, vector<16x1xf32>
    %c0_i32 = arith.constant 0 : i32
    %c128_i32 = arith.constant 128 : i32
    %6 = arith.muli %c0_i32, %c128_i32 : i32
    %7 = tpu.assume_multiple %6, 128 : i32
    %8 = arith.index_cast %7 : i32 to index
    %c0_11 = arith.constant 0 : index
    %9 = vector.load %arg1[%8, %c0_11] : memref<128x12xf32, #tpu.memory_space<vmem>>, vector<128x12xf32>
    %10 = tpu.transpose %9, [1, 0] : vector<128x12xf32> -> vector<12x128xf32>
    %11 = arith.truncf %10 : vector<12x128xf32> to vector<12x128xbf16>
    %cst = arith.constant dense<0.000000e+00> : vector<32x128xf32>
    %12 = tpu.matmul %0, %11, %cst {dimension_numbers = #tpu.dot_dimension_numbers<[1], [0], [0], [1], [0, 0, 1, 1], [], []>} : vector<32x12xbf16>, vector<12x128xbf16>, vector<32x128xf32> -> vector<32x128xf32>
    %13 = vector.broadcast %1 : vector<32x1xf32> to vector<32x128xf32>
    %14 = arith.addf %12, %13 : vector<32x128xf32>
    %cst_12 = arith.constant 0.000000e+00 : f32
    %15 = vector.broadcast %cst_12 : f32 to vector<32x128xf32>
    %16 = arith.maximumf %14, %15 : vector<32x128xf32>
    %17 = arith.truncf %16 : vector<32x128xf32> to vector<32x128xbf16>
    %cst_13 = arith.constant dense<0.000000e+00> : vector<32x128xf32>
    %18 = tpu.matmul %2, %17, %cst_13 {dimension_numbers = #tpu.dot_dimension_numbers<[1], [0], [0], [1], [0, 0, 1, 1], [], []>} : vector<32x32xbf16>, vector<32x128xbf16>, vector<32x128xf32> -> vector<32x128xf32>
    %19 = vector.broadcast %3 : vector<32x1xf32> to vector<32x128xf32>
    %20 = arith.addf %18, %19 : vector<32x128xf32>
    %cst_14 = arith.constant 0.000000e+00 : f32
    %21 = vector.broadcast %cst_14 : f32 to vector<32x128xf32>
    %22 = arith.maximumf %20, %21 : vector<32x128xf32>
    %23 = arith.truncf %22 : vector<32x128xf32> to vector<32x128xbf16>
    %cst_15 = arith.constant dense<0.000000e+00> : vector<16x128xf32>
    %24 = tpu.matmul %4, %23, %cst_15 {dimension_numbers = #tpu.dot_dimension_numbers<[1], [0], [0], [1], [0, 0, 1, 1], [], []>} : vector<16x32xbf16>, vector<32x128xbf16>, vector<16x128xf32> -> vector<16x128xf32>
    %25 = vector.broadcast %5 : vector<16x1xf32> to vector<16x128xf32>
    %26 = arith.addf %24, %25 : vector<16x128xf32>
    %27 = tpu.transpose %26, [1, 0] : vector<16x128xf32> -> vector<128x16xf32>
    %28 = arith.index_cast %7 : i32 to index
    %c0_16 = arith.constant 0 : index
    %29 = vector.load %arg8[%28, %c0_16] : memref<128x16xf32, #tpu.memory_space<vmem>>, vector<128x16xf32>
    tpu.vector_store %arg8[%28, %c0_16], %27 {strides = array<i32>} : memref<128x16xf32, #tpu.memory_space<vmem>>, vector<128x16xf32>,
    %c1_i32 = arith.constant 1 : i32
    return
  }
  func.func @transform_0(%arg0: i32) -> (i32, i32) {
    %c0_i32 = arith.constant 0 : i32
    %c0_i32_0 = arith.constant 0 : i32
    return %arg0, %c0_i32 : i32, i32
  }
  func.func @transform_1(%arg0: i32) -> (i32, i32) {
    %c0_i32 = arith.constant 0 : i32
    %c0_i32_0 = arith.constant 0 : i32
    %c0_i32_1 = arith.constant 0 : i32
    return %c0_i32, %c0_i32_0 : i32, i32
  }
  func.func @transform_2(%arg0: i32) -> (i32, i32) {
    %c0_i32 = arith.constant 0 : i32
    %c0_i32_0 = arith.constant 0 : i32
    %c0_i32_1 = arith.constant 0 : i32
    return %c0_i32, %c0_i32_0 : i32, i32
  }
  func.func @transform_3(%arg0: i32) -> (i32, i32) {
    %c0_i32 = arith.constant 0 : i32
    %c0_i32_0 = arith.constant 0 : i32
    %c0_i32_1 = arith.constant 0 : i32
    return %c0_i32, %c0_i32_0 : i32, i32
  }
  func.func @transform_4(%arg0: i32) -> (i32, i32) {
    %c0_i32 = arith.constant 0 : i32
    %c0_i32_0 = arith.constant 0 : i32
    %c0_i32_1 = arith.constant 0 : i32
    return %c0_i32, %c0_i32_0 : i32, i32
  }
  func.func @transform_5(%arg0: i32) -> (i32, i32) {
    %c0_i32 = arith.constant 0 : i32
    %c0_i32_0 = arith.constant 0 : i32
    %c0_i32_1 = arith.constant 0 : i32
    return %c0_i32, %c0_i32_0 : i32, i32
  }
  func.func @transform_6(%arg0: i32) -> (i32, i32) {
    %c0_i32 = arith.constant 0 : i32
    %c0_i32_0 = arith.constant 0 : i32
    %c0_i32_1 = arith.constant 0 : i32
    return %c0_i32, %c0_i32_0 : i32, i32
  }
  func.func @transform_7(%arg0: i32) -> (i32, i32) {
    %c0_i32 = arith.constant 0 : i32
    %c0_i32_0 = arith.constant 0 : i32
    return %arg0, %c0_i32 : i32, i32
  }
}

</mosaic_0001>

<llo_original>
// kernel: tpu_custom_call.1
$region0: #{tpu_custom_call.1}
  #allocation0 [shape = 'u32[]', space=smem, size = 0x4, offset = 0x4, fixed_abs, tag = 'smem constant byte address 0x4 - core index']
  #allocation1 [shape = 'u32[144,128]{1,0:T(1,128)}', space=vmem, size = 0x12000, scoped, tag = 'internal scratch']
  %s0 = inlined_call_operand.vmem [shape: f32[16,12], index: 0, kind: input, shape index: {}]
  %s1 = inlined_call_operand.vmem [shape: bf16[32,12], index: 1, kind: input, shape index: {}]
  %s2 = inlined_call_operand.vmem [shape: f32[32,1], index: 2, kind: input, shape index: {}]
  %s3 = inlined_call_operand.vmem [shape: bf16[32,32], index: 3, kind: input, shape index: {}]
  %s4 = inlined_call_operand.vmem [shape: f32[32,1], index: 4, kind: input, shape index: {}]
  %s5 = inlined_call_operand.vmem [shape: bf16[16,32], index: 5, kind: input, shape index: {}]
  %s6 = inlined_call_operand.vmem [shape: f32[16,1], index: 6, kind: input, shape index: {}]
  %s7 = inlined_call_operand.hbm [shape: f32[16,16], index: 7, kind: output, shape index: {}]
  %s8 = sld [smem:[#allocation0]]
  $region38: #{tpu_custom_call.1} parent=0
    _
  %s10 = ssub.s32 1, %s8
  %s11 = scalar_select 0, %s10, %s8
  $region1: #{tpu_custom_call.1} parent=0
    #allocation2 [shape = 'u8[65536]{0}', space=vmem, size = 0x10000, scoped, tag = 'output window, operand 0, single buffered']
    #allocation3 [shape = 's32[1]{0}', space=sflag, size = 0x4, scoped, tag = 'scoped memory for tpu_custom_call.1']
    %12 = vsyncpa [#allocation3], 0
    // Predicated region
    $region2: #{tpu_custom_call.1} parent=1 // pred_check
      _
    $region3: #{tpu_custom_call.1} parent=1 // pred_check_branch
      %14 = sbr.rel (0) target = $region5
    $region4: #{tpu_custom_call.1} parent=1 // pred_region
      _
    $region5: #{tpu_custom_call.1} parent=1 // pred_fallthru
      _
    // Predicated region
    $region6: #{tpu_custom_call.1} parent=1 // pred_check
      _
    $region7: #{tpu_custom_call.1} parent=1 // pred_check_branch
      %16 = sbr.rel (0) target = $region9
    $region8: #{tpu_custom_call.1} parent=1 // pred_region
      _
    $region9: #{tpu_custom_call.1} parent=1 // pred_fallthru
      _
    // Predicated region
    $region10: #{tpu_custom_call.1} parent=1 // pred_check
      _
    $region11: #{tpu_custom_call.1} parent=1 // pred_check_branch
      %18 = sbr.rel (0) target = $region13
    $region12: #{tpu_custom_call.1} parent=1 // pred_region
      _
    $region13: #{tpu_custom_call.1} parent=1 // pred_fallthru
      _
    // Predicated region
    $region14: #{tpu_custom_call.1} parent=1 // pred_check
      _
    $region15: #{tpu_custom_call.1} parent=1 // pred_check_branch
      %20 = sbr.rel (0) target = $region17
    $region16: #{tpu_custom_call.1} parent=1 // pred_region
      _
    $region17: #{tpu_custom_call.1} parent=1 // pred_fallthru
      _
    // Predicated region
    $region18: #{tpu_custom_call.1} parent=1 // pred_check
      _
    $region19: #{tpu_custom_call.1} parent=1 // pred_check_branch
      %22 = sbr.rel (0) target = $region21
    $region20: #{tpu_custom_call.1} parent=1 // pred_region
      _
    $region21: #{tpu_custom_call.1} parent=1 // pred_fallthru
      _
    // Predicated region
    $region22: #{tpu_custom_call.1} parent=1 // pred_check
      _
    $region23: #{tpu_custom_call.1} parent=1 // pred_check_branch
      %24 = sbr.rel (0) target = $region25
    $region24: #{tpu_custom_call.1} parent=1 // pred_region
      _
    $region25: #{tpu_custom_call.1} parent=1 // pred_fallthru
      _
    // Predicated region
    $region26: #{tpu_custom_call.1} parent=1 // pred_check
      _
    $region27: #{tpu_custom_call.1} parent=1 // pred_check_branch
      %26 = sbr.rel (0) target = $region29
    $region28: #{tpu_custom_call.1} parent=1 // pred_region
      _
    $region29: #{tpu_custom_call.1} parent=1 // pred_fallthru
      _
    %v28 = vld [vmem:[%s1] sm:$0xf]
    %v29 = vld [vmem:[%s1 + $0x4] sm:$0xf]
    %v30 = vld [vmem:[%s1 + $0x8] sm:$0xf]
    %v31 = vld [vmem:[%s1 + $0xc] sm:$0xf]
    %v32 = vld [vmem:[%s2] sm:$0xff]
    %v33 = vld [vmem:[%s2 + $0x8] sm:$0xff]
    %v34 = vld [vmem:[%s2 + $0x10] sm:$0xff]
    %v35 = vld [vmem:[%s2 + $0x18] sm:$0xff]
    %v36 = vld [vmem:[%s3] sm:$0xf]
    %v37 = vld [vmem:[%s3 + $0x4] sm:$0xf]
    %v38 = vld [vmem:[%s3 + $0x8] sm:$0xf]
    %v39 = vld [vmem:[%s3 + $0xc] sm:$0xf]
    %v40 = vld [vmem:[%s4] sm:$0xff]
    %v41 = vld [vmem:[%s4 + $0x8] sm:$0xff]
    %v42 = vld [vmem:[%s4 + $0x10] sm:$0xff]
    %v43 = vld [vmem:[%s4 + $0x18] sm:$0xff]
    %v44 = vld [vmem:[%s5] sm:$0xf]
    %v45 = vld [vmem:[%s5 + $0x4] sm:$0xf]
    %v46 = vld [vmem:[%s6] sm:$0xff]
    %v47 = vld [vmem:[%s6 + $0x8] sm:$0xff]
    %v48 = vld [vmem:[%s0] sm:$0xff]
    %v49 = vld [vmem:[%s0 + $0x8] sm:$0xff]
    %v50 = vld [vmem:[%s0 + $0x10] sm:$0xff]
    %v51 = vld [vmem:[%s0 + $0x18] sm:$0xff]
    %v52 = vld [vmem:[%s0 + $0x20] sm:$0xff]
    %v53 = vld [vmem:[%s0 + $0x28] sm:$0xff]
    %v54 = vld [vmem:[%s0 + $0x30] sm:$0xff]
    %v55 = vld [vmem:[%s0 + $0x38] sm:$0xff]
    %v56 = vld [vmem:[%s0 + $0x40] sm:$0xff]
    %v57 = vld [vmem:[%s0 + $0x48] sm:$0xff]
    %v58 = vld [vmem:[%s0 + $0x50] sm:$0xff]
    %v59 = vld [vmem:[%s0 + $0x58] sm:$0xff]
    %v60 = vld [vmem:[%s0 + $0x60] sm:$0xff]
    %v61 = vld [vmem:[%s0 + $0x68] sm:$0xff]
    %v62 = vld [vmem:[%s0 + $0x70] sm:$0xff]
    %v63 = vld [vmem:[%s0 + $0x78] sm:$0xff]
    %64 = vxpose.xlu0.b32.start [1/16] %v48, 128
    %65 = vxpose.xlu0.b32.cont [2/16] %v49, 128
    %66 = vxpose.xlu0.b32.cont [3/16] %v50, 128
    %67 = vxpose.xlu0.b32.cont [4/16] %v51, 128
    %68 = vxpose.xlu0.b32.cont [5/16] %v52, 128
    %69 = vxpose.xlu0.b32.cont [6/16] %v53, 128
    %70 = vxpose.xlu0.b32.cont [7/16] %v54, 128
    %71 = vxpose.xlu0.b32.cont [8/16] %v55, 128
    %72 = vxpose.xlu0.b32.cont [9/16] %v56, 128
    %73 = vxpose.xlu0.b32.cont [10/16] %v57, 128
    %74 = vxpose.xlu0.b32.cont [11/16] %v58, 128
    %75 = vxpose.xlu0.b32.cont [12/16] %v59, 128
    %76 = vxpose.xlu0.b32.cont [13/16] %v60, 128
    %77 = vxpose.xlu0.b32.cont [14/16] %v61, 128
    %78 = vxpose.xlu0.b32.cont [15/16] %v62, 128
    %79 = vxpose.xlu0.b32.end [16/16] %v63, 128
    %v80 = vpop.trf.xlu0
    %v81 = vpop.trf.xlu0
    %v82 = vpop.trf.xlu0
    %v83 = vpop.trf.xlu0
    %v84 = vpop.trf.xlu0
    %v85 = vpop.trf.xlu0
    %v86 = vpop.trf.xlu0
    %v87 = vpop.trf.xlu0
    %v88 = vpop.trf.xlu0
    %v89 = vpop.trf.xlu0
    %v90 = vpop.trf.xlu0
    %v91 = vpop.trf.xlu0
    %v92 = vpop.trf.xlu0
    %v93 = vpop.trf.xlu0
    %v94 = vpop.trf.xlu0
    %v95 = vpop.trf.xlu0
    %v96 = vpack.c.bf16 %v81, %v80
    %98 = vset.pattern.permute.xlu0 0
    %99 = vperm.xlu0 %98, %v32
    %v100 = vpop.permute.xlu0 %99
    %103 = vset.pattern.permute.xlu0 0
    %104 = vperm.xlu0 %103, %v33
    %v105 = vpop.permute.xlu0 %104
    %108 = vset.pattern.permute.xlu0 0
    %109 = vperm.xlu0 %108, %v34
    %v110 = vpop.permute.xlu0 %109
    %113 = vset.pattern.permute.xlu0 0
    %114 = vperm.xlu0 %113, %v35
    %v115 = vpop.permute.xlu0 %114
    %v121 = vunpack.c.l.b16 %v28
    %v122 = vunpack.c.l.b16 %v29
    %v123 = vunpack.c.l.b16 %v30
    %v124 = vunpack.c.l.b16 %v31
    %v125 = vpack.c.b16 %v122, %v121
    %v126 = vpack.c.b16 %v124, %v123
    %vm127 = vcmask 97280
    %v129 = vsel %vm127, %v125, 0
    %v132 = vsel %vm127, %v126, 0
    %vm134 = vcmask 1045504
    %v136 = vsel %vm134, %v96, 0
    %138 = vmatprep.subr.bf16.mxu0 0
    %139 = vmatpush1.bf16.msra.mxu0 %v136
    %140 = vmatprep.subr.bf16.mxu0 0
    %141 = vmatpush1.bf16.msra.mxu0 0
    %142 = vmatprep.subr.bf16.mxu0 0
    %143 = vmatpush1.bf16.msra.mxu0 0
    %144 = vmatprep.subr.bf16.mxu0 0
    %145 = vmatpush1.bf16.msra.mxu0 0
    %146 = vmatprep.subr.bf16.mxu0 0
    %147 = vmatpush1.bf16.msra.mxu0 0
    %148 = vmatprep.subr.bf16.mxu0 0
    %149 = vmatpush1.bf16.msra.mxu0 0
    %150 = vmatprep.subr.bf16.mxu0 0
    %151 = vmatpush1.bf16.msra.mxu0 0
    %152 = vmatprep.subr.bf16.mxu0 0
    %153 = vmatpush1.bf16.msra.mxu0 0
    %154 = vmatprep.subr.bf16.mxu0 0
    %155 = vmatpush1.bf16.msra.mxu0 0
    %156 = vmatprep.subr.bf16.mxu0 0
    %157 = vmatpush1.bf16.msra.mxu0 0
    %158 = vmatprep.subr.bf16.mxu0 0
    %159 = vmatpush1.bf16.msra.mxu0 0
    %160 = vmatprep.subr.bf16.mxu0 0
    %161 = vmatpush1.bf16.msra.mxu0 0
    %162 = vmatprep.subr.bf16.mxu0 0
    %163 = vmatpush1.bf16.msra.mxu0 0
    %164 = vmatprep.subr.bf16.mxu0 0
    %165 = vmatpush1.bf16.msra.mxu0 0
    %166 = vmatprep.subr.bf16.mxu0 0
    %167 = vmatpush1.bf16.msra.mxu0 0
    %168 = vmatprep.subr.bf16.mxu0 0
    %169 = vmatpush1.bf16.msra.mxu0 0
    %170 = vmatprep.mubr.bf16.mxu0 0
    %171 = vmatmul.mubr.bf16.gmra.mrb[0].mxu0 %v129
    %v172 = vpop.f32.mrb[0].mxu0
    %v173 = vadd.f32 %v100, %v172
    %v174 = vpop.f32.mrb[0].mxu0
    %v175 = vpop.f32.mrb[0].mxu0
    %v176 = vadd.f32 %v105, %v175
    %v177 = vpop.f32.mrb[0].mxu0
    %178 = vmatprep.mubr.bf16.mxu0 0
    %179 = vmatmul.mubr.bf16.gmra.mrb[0].mxu0 %v132
    %v180 = vpop.f32.mrb[0].mxu0
    %v181 = vadd.f32 %v110, %v180
    %v182 = vpop.f32.mrb[0].mxu0
    %v183 = vpop.f32.mrb[0].mxu0
    %v184 = vadd.f32 %v115, %v183
    %v185 = vpop.f32.mrb[0].mxu0
    %186 = vdwg.mxu0
    %v187 = vmax.f32 %v173, 0.0
    %v188 = vmax.f32 %v176, 0.0
    %v189 = vmax.f32 %v181, 0.0
    %v190 = vmax.f32 %v184, 0.0
    %v191 = vpack.c.bf16 %v188, %v187
    %v192 = vpack.c.bf16 %v190, %v189
    %194 = vset.pattern.permute.xlu0 0
    %195 = vperm.xlu0 %194, %v40
    %v196 = vpop.permute.xlu0 %195
    %199 = vset.pattern.permute.xlu0 0
    %200 = vperm.xlu0 %199, %v41
    %v201 = vpop.permute.xlu0 %200
    %204 = vset.pattern.permute.xlu0 0
    %205 = vperm.xlu0 %204, %v42
    %v206 = vpop.permute.xlu0 %205
    %209 = vset.pattern.permute.xlu0 0
    %210 = vperm.xlu0 %209, %v43
    %v211 = vpop.permute.xlu0 %210
    %v217 = vunpack.c.l.b16 %v36
    %v218 = vunpack.c.l.b16 %v37
    %v219 = vunpack.c.l.b16 %v38
    %v220 = vunpack.c.l.b16 %v39
    %v221 = vpack.c.b16 %v218, %v217
    %v222 = vpack.c.b16 %v220, %v219
    %vm223 = vcmask 261120
    %v225 = vsel %vm223, %v221, 0
    %v228 = vsel %vm223, %v222, 0
    %230 = vmatprep.subr.bf16.mxu0 0
    %231 = vmatpush1.bf16.msra.mxu0 %v191
    %232 = vmatprep.subr.bf16.mxu0 0
    %233 = vmatpush1.bf16.msra.mxu0 %v192
    %234 = vmatprep.subr.bf16.mxu0 0
    %235 = vmatpush1.bf16.msra.mxu0 0
    %236 = vmatprep.subr.bf16.mxu0 0
    %237 = vmatpush1.bf16.msra.mxu0 0
    %238 = vmatprep.subr.bf16.mxu0 0
    %239 = vmatpush1.bf16.msra.mxu0 0
    %240 = vmatprep.subr.bf16.mxu0 0
    %241 = vmatpush1.bf16.msra.mxu0 0
    %242 = vmatprep.subr.bf16.mxu0 0
    %243 = vmatpush1.bf16.msra.mxu0 0
    %244 = vmatprep.subr.bf16.mxu0 0
    %245 = vmatpush1.bf16.msra.mxu0 0
    %246 = vmatprep.subr.bf16.mxu0 0
    %247 = vmatpush1.bf16.msra.mxu0 0
    %248 = vmatprep.subr.bf16.mxu0 0
    %249 = vmatpush1.bf16.msra.mxu0 0
    %250 = vmatprep.subr.bf16.mxu0 0
    %251 = vmatpush1.bf16.msra.mxu0 0
    %252 = vmatprep.subr.bf16.mxu0 0
    %253 = vmatpush1.bf16.msra.mxu0 0
    %254 = vmatprep.subr.bf16.mxu0 0
    %255 = vmatpush1.bf16.msra.mxu0 0
    %256 = vmatprep.subr.bf16.mxu0 0
    %257 = vmatpush1.bf16.msra.mxu0 0
    %258 = vmatprep.subr.bf16.mxu0 0
    %259 = vmatpush1.bf16.msra.mxu0 0
    %260 = vmatprep.subr.bf16.mxu0 0
    %261 = vmatpush1.bf16.msra.mxu0 0
    %262 = vmatprep.mubr.bf16.mxu0 0
    %263 = vmatmul.mubr.bf16.gmra.mrb[0].mxu0 %v225
    %v264 = vpop.f32.mrb[0].mxu0
    %v265 = vadd.f32 %v196, %v264
    %v266 = vpop.f32.mrb[0].mxu0
    %v267 = vpop.f32.mrb[0].mxu0
    %v268 = vadd.f32 %v201, %v267
    %v269 = vpop.f32.mrb[0].mxu0
    %270 = vmatprep.mubr.bf16.mxu0 0
    %271 = vmatmul.mubr.bf16.gmra.mrb[0].mxu0 %v228
    %v272 = vpop.f32.mrb[0].mxu0
    %v273 = vadd.f32 %v206, %v272
    %v274 = vpop.f32.mrb[0].mxu0
    %v275 = vpop.f32.mrb[0].mxu0
    %v276 = vadd.f32 %v211, %v275
    %v277 = vpop.f32.mrb[0].mxu0
    %278 = vdwg.mxu0
    %v279 = vmax.f32 %v265, 0.0
    %v280 = vmax.f32 %v268, 0.0
    %v281 = vmax.f32 %v273, 0.0
    %v282 = vmax.f32 %v276, 0.0
    %v283 = vpack.c.bf16 %v280, %v279
    %v284 = vpack.c.bf16 %v282, %v281
    %286 = vset.pattern.permute.xlu0 0
    %287 = vperm.xlu0 %286, %v46
    %v288 = vpop.permute.xlu0 %287
    %291 = vset.pattern.permute.xlu0 0
    %292 = vperm.xlu0 %291, %v47
    %v293 = vpop.permute.xlu0 %292
    %v297 = vunpack.c.l.b16 %v44
    %v298 = vunpack.c.l.b16 %v45
    %v299 = vpack.c.b16 %v298, %v297
    %v301 = vsel %vm223, %v299, 0
    %303 = vmatprep.subr.bf16.mxu0 0
    %304 = vmatpush1.bf16.msra.mxu0 %v283
    %305 = vmatprep.subr.bf16.mxu0 0
    %306 = vmatpush1.bf16.msra.mxu0 %v284
    %307 = vmatprep.subr.bf16.mxu0 0
    %308 = vmatpush1.bf16.msra.mxu0 0
    %309 = vmatprep.subr.bf16.mxu0 0
    %310 = vmatpush1.bf16.msra.mxu0 0
    %311 = vmatprep.subr.bf16.mxu0 0
    %312 = vmatpush1.bf16.msra.mxu0 0
    %313 = vmatprep.subr.bf16.mxu0 0
    %314 = vmatpush1.bf16.msra.mxu0 0
    %315 = vmatprep.subr.bf16.mxu0 0
    %316 = vmatpush1.bf16.msra.mxu0 0
    %317 = vmatprep.subr.bf16.mxu0 0
    %318 = vmatpush1.bf16.msra.mxu0 0
    %319 = vmatprep.subr.bf16.mxu0 0
    %320 = vmatpush1.bf16.msra.mxu0 0
    %321 = vmatprep.subr.bf16.mxu0 0
    %322 = vmatpush1.bf16.msra.mxu0 0
    %323 = vmatprep.subr.bf16.mxu0 0
    %324 = vmatpush1.bf16.msra.mxu0 0
    %325 = vmatprep.subr.bf16.mxu0 0
    %326 = vmatpush1.bf16.msra.mxu0 0
    %327 = vmatprep.subr.bf16.mxu0 0
    %328 = vmatpush1.bf16.msra.mxu0 0
    %329 = vmatprep.subr.bf16.mxu0 0
    %330 = vmatpush1.bf16.msra.mxu0 0
    %331 = vmatprep.subr.bf16.mxu0 0
    %332 = vmatpush1.bf16.msra.mxu0 0
    %333 = vmatprep.subr.bf16.mxu0 0
    %334 = vmatpush1.bf16.msra.mxu0 0
    %335 = vmatprep.mubr.bf16.mxu0 0
    %336 = vmatmul.mubr.bf16.gmra.mrb[0].mxu0 %v301
    %v337 = vpop.f32.mrb[0].mxu0
    %v338 = vadd.f32 %v288, %v337
    %v339 = vpop.f32.mrb[0].mxu0
    %v340 = vpop.f32.mrb[0].mxu0
    %v341 = vadd.f32 %v293, %v340
    %v342 = vpop.f32.mrb[0].mxu0
    %343 = vdwg.mxu0
    %344 = vxpose.xlu0.b32.start [1/16] %v338, 128
    %345 = vxpose.xlu0.b32.cont [2/16] %v341, 128
    %346 = vxpose.xlu0.b32.cont [3/16] 0.0, 128
    %347 = vxpose.xlu0.b32.cont [4/16] 0.0, 128
    %348 = vxpose.xlu0.b32.cont [5/16] 0.0, 128
    %349 = vxpose.xlu0.b32.cont [6/16] 0.0, 128
    %350 = vxpose.xlu0.b32.cont [7/16] 0.0, 128
    %351 = vxpose.xlu0.b32.cont [8/16] 0.0, 128
    %352 = vxpose.xlu0.b32.cont [9/16] 0.0, 128
    %353 = vxpose.xlu0.b32.cont [10/16] 0.0, 128
    %354 = vxpose.xlu0.b32.cont [11/16] 0.0, 128
    %355 = vxpose.xlu0.b32.cont [12/16] 0.0, 128
    %356 = vxpose.xlu0.b32.cont [13/16] 0.0, 128
    %357 = vxpose.xlu0.b32.cont [14/16] 0.0, 128
    %358 = vxpose.xlu0.b32.cont [15/16] 0.0, 128
    %359 = vxpose.xlu0.b32.end [16/16] 0.0, 128
    %v360 = vpop.trf.xlu0
    %v361 = vpop.trf.xlu0
    %v362 = vpop.trf.xlu0
    %v363 = vpop.trf.xlu0
    %v364 = vpop.trf.xlu0
    %v365 = vpop.trf.xlu0
    %v366 = vpop.trf.xlu0
    %v367 = vpop.trf.xlu0
    %v368 = vpop.trf.xlu0
    %v369 = vpop.trf.xlu0
    %v370 = vpop.trf.xlu0
    %v371 = vpop.trf.xlu0
    %v372 = vpop.trf.xlu0
    %v373 = vpop.trf.xlu0
    %v374 = vpop.trf.xlu0
    %v375 = vpop.trf.xlu0
    %vm376 = vcmask 130048
    %377 = vst.msk [vmem:[#allocation2] sm:$0xff] %vm376, %v360
    %378 = vst.msk [vmem:[#allocation2 + $0x8] sm:$0xff] %vm376, %v361
    %379 = vst.msk [vmem:[#allocation2 + $0x10] sm:$0xff] %vm376, %v362
    %380 = vst.msk [vmem:[#allocation2 + $0x18] sm:$0xff] %vm376, %v363
    %381 = vst.msk [vmem:[#allocation2 + $0x20] sm:$0xff] %vm376, %v364
    %382 = vst.msk [vmem:[#allocation2 + $0x28] sm:$0xff] %vm376, %v365
    %383 = vst.msk [vmem:[#allocation2 + $0x30] sm:$0xff] %vm376, %v366
    %384 = vst.msk [vmem:[#allocation2 + $0x38] sm:$0xff] %vm376, %v367
    %385 = vst.msk [vmem:[#allocation2 + $0x40] sm:$0xff] %vm376, %v368
    %386 = vst.msk [vmem:[#allocation2 + $0x48] sm:$0xff] %vm376, %v369
    %387 = vst.msk [vmem:[#allocation2 + $0x50] sm:$0xff] %vm376, %v370
    %388 = vst.msk [vmem:[#allocation2 + $0x58] sm:$0xff] %vm376, %v371
    %389 = vst.msk [vmem:[#allocation2 + $0x60] sm:$0xff] %vm376, %v372
    %390 = vst.msk [vmem:[#allocation2 + $0x68] sm:$0xff] %vm376, %v373
    %391 = vst.msk [vmem:[#allocation2 + $0x70] sm:$0xff] %vm376, %v374
    %392 = vst.msk [vmem:[#allocation2 + $0x78] sm:$0xff] %vm376, %v375
    // Predicated region
    $region30: #{tpu_custom_call.1} parent=1 // pred_check
      _
    $region31: #{tpu_custom_call.1} parent=1 // pred_check_branch
      %394 = sbr.rel (0) target = $region33
    $region32: #{tpu_custom_call.1} parent=1 // pred_region
      %s396 = ssub.s32 2048, 256
      %397 = vsyncadd [#allocation3], %s396
      %s398 = sshll.u32 [#allocation2], 4
      %s399 = int_to_ptr.vmem [resolvable:$true] %s398
      %404 = dma.vmem_to_hbm [thread:$0]  %s399, 256, %s7, [#allocation3], 128, 128, 8
    $region33: #{tpu_custom_call.1} parent=1 // pred_fallthru
      _
    // Predicated region
    $region34: #{tpu_custom_call.1} parent=1 // pred_check
      _
    $region35: #{tpu_custom_call.1} parent=1 // pred_check_branch
      %406 = sbr.rel (0) target = $region37
    $region36: #{tpu_custom_call.1} parent=1 // pred_region
      %407 = dma.done [#allocation3], 2048
    $region37: #{tpu_custom_call.1} parent=1 // pred_fallthru
      _
    %408 = vsyncpa [#allocation3], 1

</llo_original>
